<compile_context>
chip_gen: v7x
topology: tpu7x:2x2x1
jax: 0.10.0
libtpu: 0.0.40
codegen_flags: <defaults>
</compile_context>

<pallas_src>
import functools

import jax
import jax.numpy as jnp
from jax import lax
from jax.experimental import pallas as pl
from jax.experimental.pallas import tpu as pltpu


# ---------------------------------------------------------------------------
# small helpers
# ---------------------------------------------------------------------------
def _round_up(x, m):
    return -(-x // m) * m


def _pick_row_tile(M, tile_m):
    """Row tile (multiple of 8) and padded row count."""
    tm = tile_m if M >= tile_m else max(8, _round_up(M, 8))
    return tm, _round_up(M, tm)


def _pick_col_tile(N, tile_n):
    """Column tile (multiple of 128 -> lane-dense stores) and padded cols."""
    n128 = _round_up(N, 128)
    if n128 <= tile_n:
        return n128, n128
    tn = max(128, tile_n - tile_n % 128)
    return tn, _round_up(N, tn)


def _vmem_limit(est_bytes):
    # Leave headroom above the estimate but stay within v7x physical VMEM.
    return int(min(max(2 * est_bytes, 32 * 1024 * 1024), 64 * 1024 * 1024))


# ---------------------------------------------------------------------------
# 1) fused LayerNorm + Linear (pre_output_dict[col])
# ---------------------------------------------------------------------------
def _ln_linear_kernel(x_ref, g_ref, beta_ref, w_ref, bias_ref, o_ref, *, eps):
    x = x_ref[...].astype(jnp.float32)
    mu = jnp.mean(x, axis=-1, keepdims=True)
    xc = x - mu
    var = jnp.mean(xc * xc, axis=-1, keepdims=True)
    xn = xc * lax.rsqrt(var + eps)                      # EUP rsqrt (free slot)
    xn = xn * g_ref[...] + beta_ref[...]
    out = jnp.dot(xn.astype(w_ref.dtype), w_ref[...],
                  preferred_element_type=jnp.float32)
    o_ref[...] = (out + bias_ref[...]).astype(o_ref.dtype)


def layernorm_linear(x, gamma, beta, w_t, b, *, eps=1e-5, tile_m=512,
                     compute_dtype=jnp.bfloat16):
    """LayerNorm over the last dim followed by Linear.  w_t: (d_in, d_out)."""
    orig_shape = x.shape
    d_in = orig_shape[-1]
    d_out = w_t.shape[1]
    out_dtype = x.dtype

    x2 = x.reshape(-1, d_in)
    M = x2.shape[0]
    tm, M_pad = _pick_row_tile(M, tile_m)
    if M_pad != M:
        x2 = jnp.pad(x2, ((0, M_pad - M), (0, 0)))

    w_c = w_t.astype(compute_dtype)
    g2 = gamma.reshape(1, d_in).astype(jnp.float32)
    beta2 = beta.reshape(1, d_in).astype(jnp.float32)
    b2 = b.reshape(1, d_out).astype(jnp.float32)

    n_m = M_pad // tm
    cs = jnp.dtype(compute_dtype).itemsize
    os_ = jnp.dtype(out_dtype).itemsize
    vmem_est = (2 * tm * d_in * 4            # x tile (f32, double-buffered)
                + d_in * d_out * cs          # weight (resident)
                + 2 * tm * d_out * os_       # output tile (double-buffered)
                + 3 * (d_in + d_out) * 4)    # ln params + bias
    cost = pl.CostEstimate(
        flops=2 * M_pad * d_in * d_out + 8 * M_pad * d_in,
        transcendentals=M_pad,
        bytes_accessed=int(M_pad * d_in * 4 + d_in * d_out * cs
                           + M_pad * d_out * os_),
    )

    out = pl.pallas_call(
        functools.partial(_ln_linear_kernel, eps=eps),
        out_shape=jax.ShapeDtypeStruct((M_pad, d_out), out_dtype),
        grid_spec=pltpu.PrefetchScalarGridSpec(
            num_scalar_prefetch=0,
            grid=(n_m,),
            in_specs=[
                pl.BlockSpec((tm, d_in), lambda i: (i, 0)),       # x tile
                pl.BlockSpec((1, d_in), lambda i: (0, 0)),        # gamma
                pl.BlockSpec((1, d_in), lambda i: (0, 0)),        # beta
                pl.BlockSpec((d_in, d_out), lambda i: (0, 0)),    # W^T
                pl.BlockSpec((1, d_out), lambda i: (0, 0)),       # bias
            ],
            out_specs=pl.BlockSpec((tm, d_out), lambda i: (i, 0)),
        ),
        compiler_params=pltpu.CompilerParams(
            dimension_semantics=("parallel",),
            vmem_limit_bytes=_vmem_limit(vmem_est),
        ),
        cost_estimate=cost,
    )(x2, g2, beta2, w_c, b2)

    out = out[:M]
    return out.reshape(*orig_shape[:-1], d_out)


# ---------------------------------------------------------------------------
# 2) single Linear head (TemporalOutput / ImgOutput)
# ---------------------------------------------------------------------------
def _linear_kernel(x_ref, w_ref, b_ref, o_ref):
    out = jnp.dot(x_ref[...], w_ref[...], preferred_element_type=jnp.float32)
    o_ref[...] = (out + b_ref[...]).astype(o_ref.dtype)


def linear_head(x, w_t, b, *, tile_m=512, tile_n=1024,
                compute_dtype=jnp.bfloat16):
    """out = x @ w_t + b.  w_t: (d_in, d_out)."""
    orig_shape = x.shape
    d_in = orig_shape[-1]
    d_out = w_t.shape[1]
    out_dtype = x.dtype

    x2 = x.reshape(-1, d_in)
    M = x2.shape[0]
    tm, M_pad = _pick_row_tile(M, tile_m)
    if M_pad != M:
        x2 = jnp.pad(x2, ((0, M_pad - M), (0, 0)))

    tv, V_pad = _pick_col_tile(d_out, tile_n)
    if V_pad != d_out:
        w_t = jnp.pad(w_t, ((0, 0), (0, V_pad - d_out)))
        b = jnp.pad(b, ((0, V_pad - d_out),))

    x_c = x2.astype(compute_dtype)
    w_c = w_t.astype(compute_dtype)
    b2 = b.reshape(1, V_pad).astype(jnp.float32)

    n_m, n_v = M_pad // tm, V_pad // tv
    cs = jnp.dtype(compute_dtype).itemsize
    os_ = jnp.dtype(out_dtype).itemsize
    vmem_est = (2 * tm * d_in * cs + 2 * d_in * tv * cs
                + 2 * tm * tv * os_ + 2 * tv * 4)
    cost = pl.CostEstimate(
        flops=2 * M_pad * d_in * V_pad,
        transcendentals=0,
        bytes_accessed=int(M_pad * d_in * cs + d_in * V_pad * cs * n_m
                           + M_pad * V_pad * os_),
    )

    out = pl.pallas_call(
        _linear_kernel,
        out_shape=jax.ShapeDtypeStruct((M_pad, V_pad), out_dtype),
        grid_spec=pltpu.PrefetchScalarGridSpec(
            num_scalar_prefetch=0,
            grid=(n_m, n_v),
            in_specs=[
                pl.BlockSpec((tm, d_in), lambda i, j: (i, 0)),    # x tile
                pl.BlockSpec((d_in, tv), lambda i, j: (0, j)),    # W^T tile
                pl.BlockSpec((1, tv), lambda i, j: (0, j)),       # bias tile
            ],
            out_specs=pl.BlockSpec((tm, tv), lambda i, j: (i, j)),
        ),
        compiler_params=pltpu.CompilerParams(
            dimension_semantics=("parallel", "parallel"),
            vmem_limit_bytes=_vmem_limit(vmem_est),
        ),
        cost_estimate=cost,
    )(x_c, w_c, b2)

    out = out[:M, :d_out]
    return out.reshape(*orig_shape[:-1], d_out)


# ---------------------------------------------------------------------------
# 3) NlpOutput head: Linear(d,d) -> Linear(d, num_vocab)
# ---------------------------------------------------------------------------
def _nlp_output_kernel(x_ref, w1_ref, b1_ref, w2_ref, b2_ref, o_ref, h_ref):
    # First Linear: depends only on the current row tile; compute it once per
    # row tile (vocab axis is the last / sequential grid dimension) and keep
    # it in VMEM scratch for all vocab tiles.
    @pl.when(pl.program_id(1) == 0)
    def _():
        h = jnp.dot(x_ref[...], w1_ref[...], preferred_element_type=jnp.float32)
        h_ref[...] = (h + b1_ref[...]).astype(h_ref.dtype)

    # Second Linear for this (row tile, vocab tile).
    out = jnp.dot(h_ref[...], w2_ref[...], preferred_element_type=jnp.float32)
    o_ref[...] = (out + b2_ref[...]).astype(o_ref.dtype)


def nlp_output_head(x, w1_t, b1, w2_t, b2, *, tile_m=512, tile_v=1024,
                    compute_dtype=jnp.bfloat16):
    """out = (x @ w1_t + b1) @ w2_t + b2.  w1_t: (d,d); w2_t: (d, V)."""
    orig_shape = x.shape
    d_model = orig_shape[-1]
    num_vocab = w2_t.shape[1]
    out_dtype = x.dtype

    x2 = x.reshape(-1, d_model)
    M = x2.shape[0]
    tm, M_pad = _pick_row_tile(M, tile_m)
    if M_pad != M:
        x2 = jnp.pad(x2, ((0, M_pad - M), (0, 0)))

    tv, V_pad = _pick_col_tile(num_vocab, tile_v)
    if V_pad != num_vocab:
        w2_t = jnp.pad(w2_t, ((0, 0), (0, V_pad - num_vocab)))
        b2 = jnp.pad(b2, ((0, V_pad - num_vocab),))

    x_c = x2.astype(compute_dtype)
    w1_c = w1_t.astype(compute_dtype)
    w2_c = w2_t.astype(compute_dtype)
    b1_2d = b1.reshape(1, d_model).astype(jnp.float32)
    b2_2d = b2.reshape(1, V_pad).astype(jnp.float32)

    n_m, n_v = M_pad // tm, V_pad // tv
    cs = jnp.dtype(compute_dtype).itemsize
    os_ = jnp.dtype(out_dtype).itemsize
    vmem_est = (
        2 * tm * d_model * cs            # x tile (double-buffered)
        + d_model * d_model * cs         # W1 (resident)
        + 2 * d_model * tv * cs          # W2 tile (double-buffered)
        + tm * d_model * cs              # hidden scratch
        + 2 * tm * tv * os_              # output tile (double-buffered)
        + 2 * (d_model + tv) * 4         # biases
    )
    cost = pl.CostEstimate(
        flops=2 * M_pad * d_model * (d_model + V_pad),
        transcendentals=0,
        bytes_accessed=int(M_pad * d_model * cs
                           + d_model * d_model * cs
                           + n_m * d_model * V_pad * cs
                           + M_pad * V_pad * os_),
    )

    out = pl.pallas_call(
        _nlp_output_kernel,
        out_shape=jax.ShapeDtypeStruct((M_pad, V_pad), out_dtype),
        grid_spec=pltpu.PrefetchScalarGridSpec(
            num_scalar_prefetch=0,
            grid=(n_m, n_v),
            in_specs=[
                pl.BlockSpec((tm, d_model), lambda i, j: (i, 0)),        # x tile
                pl.BlockSpec((d_model, d_model), lambda i, j: (0, 0)),   # W1^T
                pl.BlockSpec((1, d_model), lambda i, j: (0, 0)),         # b1
                pl.BlockSpec((d_model, tv), lambda i, j: (0, j)),        # W2^T tile
                pl.BlockSpec((1, tv), lambda i, j: (0, j)),              # b2 tile
            ],
            out_specs=pl.BlockSpec((tm, tv), lambda i, j: (i, j)),
            scratch_shapes=[pltpu.VMEM((tm, d_model), compute_dtype)],   # hidden
        ),
        compiler_params=pltpu.CompilerParams(
            dimension_semantics=("parallel", "arbitrary"),
            vmem_limit_bytes=_vmem_limit(vmem_est),
        ),
        cost_estimate=cost,
    )(x_c, w1_c, b1_2d, w2_c, b2_2d)

    out = out[:M, :num_vocab]
    return out.reshape(*orig_shape[:-1], num_vocab)


# ---------------------------------------------------------------------------
# Output.forward (minus TransformerEncoder) composed from the kernels above
# ---------------------------------------------------------------------------
def output_forward(data_dict, params, compute_dtype=jnp.bfloat16):
    # TODO(synk): encoder_dict[col] (TransformerEncoder) and padding-mask
    # handling are not implemented as Pallas kernels; the identity is used.
    result = {}
    for col, x in data_dict.items():
        p = params[col]
        h = layernorm_linear(x, p["ln_g"], p["ln_b"], p["pre_w"], p["pre_b"],
                             compute_dtype=compute_dtype)
        if "head_w2" in p:        # NlpOutput (two chained linears)
            result[col] = nlp_output_head(h, p["head_w1"], p["head_b1"],
                                          p["head_w2"], p["head_b2"],
                                          compute_dtype=compute_dtype)
        else:                     # TemporalOutput / ImgOutput (single linear)
            result[col] = linear_head(h, p["head_w"], p["head_b"],
                                      compute_dtype=compute_dtype)
    return result


def _ref_forward(data_dict, params, eps=1e-5):
    def ln(x, g, b):
        mu = x.mean(-1, keepdims=True)
        var = ((x - mu) ** 2).mean(-1, keepdims=True)
        return (x - mu) / jnp.sqrt(var + eps) * g + b

    out = {}
    for col, x in data_dict.items():
        p = params[col]
        h = ln(x, p["ln_g"], p["ln_b"]) @ p["pre_w"] + p["pre_b"]
        if "head_w2" in p:
            out[col] = (h @ p["head_w1"] + p["head_b1"]) @ p["head_w2"] + p["head_b2"]
        else:
            out[col] = h @ p["head_w"] + p["head_b"]
    return out


if __name__ == "__main__":
    # Small shapes consistent with the module's forward.
    batch, seq, d_model = 2, 8, 32
    patch_size = 4                      # ImgOutput -> 3 * 4 * 4 = 48 outputs
    num_vocab = 512                     # small stand-in for 30522
    num_temporal_out = 1                # scaling col -> Linear(d_model, 1)

    key = jax.random.PRNGKey(0)
    keys = jax.random.split(key, 24)
    _kit = iter(keys)

    def _rnd(shape, scale=0.02):
        return jax.random.normal(next(_kit), shape, dtype=jnp.float32) * scale

    data_dict = {
        "temporal_col": jax.random.normal(next(_kit), (batch, seq, d_model), jnp.float32),
        "img_col": jax.random.normal(next(_kit), (batch, seq, d_model), jnp.float32),
        "nlp_col": jax.random.normal(next(_kit), (batch, seq, d_model), jnp.float32),
    }

    params = {}
    for col in data_dict:
        params[col] = dict(
            ln_g=jnp.ones((d_model,), jnp.float32),
            ln_b=_rnd((d_model,)),
            pre_w=_rnd((d_model, d_model)),     # pre-transposed (in, out)
            pre_b=_rnd((d_model,)),
        )
    params["temporal_col"]["head_w"] = _rnd((d_model, num_temporal_out))
    params["temporal_col"]["head_b"] = _rnd((num_temporal_out,))
    params["img_col"]["head_w"] = _rnd((d_model, 3 * patch_size * patch_size))
    params["img_col"]["head_b"] = _rnd((3 * patch_size * patch_size,))
    params["nlp_col"]["head_w1"] = _rnd((d_model, d_model))
    params["nlp_col"]["head_b1"] = _rnd((d_model,))
    params["nlp_col"]["head_w2"] = _rnd((d_model, num_vocab))
    params["nlp_col"]["head_b2"] = _rnd((num_vocab,))

    ref = _ref_forward(data_dict, params)

    # 1) Exact-precision path (f32 streaming): tight tolerance.
    out_f32 = jax.block_until_ready(
        output_forward(data_dict, params, compute_dtype=jnp.float32))
    expected_shapes = {
        "temporal_col": (batch, seq, num_temporal_out),
        "img_col": (batch, seq, 3 * patch_size * patch_size),
        "nlp_col": (batch, seq, num_vocab),
    }
    for col, exp_shape in expected_shapes.items():
        assert out_f32[col].shape == exp_shape, (col, out_f32[col].shape)
        assert jnp.allclose(out_f32[col], ref[col], atol=2e-4, rtol=2e-3), \
            f"f32 mismatch for {col}"

    # 2) Fast path (bf16 weight/activation streaming, f32 accumulation).
    out_bf16 = jax.block_until_ready(
        output_forward(data_dict, params, compute_dtype=jnp.bfloat16))
    for col, exp_shape in expected_shapes.items():
        assert out_bf16[col].shape == exp_shape, (col, out_bf16[col].shape)
        assert jnp.allclose(out_bf16[col], ref[col], atol=5e-3, rtol=5e-2), \
            f"bf16 mismatch for {col}"

    print("KERNEL_OK")
</pallas_src>

<mosaic_0001>
module attributes {stable_mosaic.version = 11 : i64} {
  func.func @_ln_linear_kernel(%arg0: i32, %arg1: memref<16x32xf32, #tpu.memory_space<vmem>>, %arg2: memref<1x32xf32, #tpu.memory_space<vmem>>, %arg3: memref<1x32xf32, #tpu.memory_space<vmem>>, %arg4: memref<32x32xf32, #tpu.memory_space<vmem>>, %arg5: memref<1x32xf32, #tpu.memory_space<vmem>>, %arg6: memref<16x32xf32, #tpu.memory_space<vmem>>) attributes {dimension_semantics = [#tpu.dimension_semantics<parallel>], iteration_bounds = array<i64: 1>, scalar_prefetch = 0 : i64, scratch_operands = 0 : i64, tpu.core_type = #tpu.core_type<tc>, window_params = [{transform_indices = @transform_0, window_bounds = array<i64: 16, 32>}, {pipeline_mode = #tpu.pipeline_mode<synchronous>, transform_indices = @transform_1, window_bounds = array<i64: 1, 32>}, {pipeline_mode = #tpu.pipeline_mode<synchronous>, transform_indices = @transform_2, window_bounds = array<i64: 1, 32>}, {pipeline_mode = #tpu.pipeline_mode<synchronous>, transform_indices = @transform_3, window_bounds = array<i64: 32, 32>}, {pipeline_mode = #tpu.pipeline_mode<synchronous>, transform_indices = @transform_4, window_bounds = array<i64: 1, 32>}, {transform_indices = @transform_5, window_bounds = array<i64: 16, 32>}]} {
    %c0 = arith.constant 0 : index
    %c0_0 = arith.constant 0 : index
    %0 = vector.load %arg1[%c0, %c0_0] : memref<16x32xf32, #tpu.memory_space<vmem>>, vector<16x32xf32>
    %cst = arith.constant dense<0.000000e+00> : vector<16xf32>
    %1 = vector.multi_reduction <add>, %0, %cst [1] : vector<16x32xf32> to vector<16xf32>
    %2 = vector.shape_cast %1 : vector<16xf32> to vector<16x1xf32>
    %cst_1 = arith.constant 3.200000e+01 : f32
    %3 = vector.broadcast %cst_1 : f32 to vector<16x1xf32>
    %4 = arith.divf %2, %3 : vector<16x1xf32>
    %5 = vector.broadcast %4 : vector<16x1xf32> to vector<16x32xf32>
    %6 = arith.subf %0, %5 : vector<16x32xf32>
    %7 = arith.mulf %6, %6 : vector<16x32xf32>
    %cst_2 = arith.constant dense<0.000000e+00> : vector<16xf32>
    %8 = vector.multi_reduction <add>, %7, %cst_2 [1] : vector<16x32xf32> to vector<16xf32>
    %9 = vector.shape_cast %8 : vector<16xf32> to vector<16x1xf32>
    %cst_3 = arith.constant 3.200000e+01 : f32
    %10 = vector.broadcast %cst_3 : f32 to vector<16x1xf32>
    %11 = arith.divf %9, %10 : vector<16x1xf32>
    %cst_4 = arith.constant 9.99999974E-6 : f32
    %12 = vector.broadcast %cst_4 : f32 to vector<16x1xf32>
    %13 = arith.addf %11, %12 : vector<16x1xf32>
    %14 = math.rsqrt %13 : vector<16x1xf32>
    %15 = vector.broadcast %14 : vector<16x1xf32> to vector<16x32xf32>
    %16 = arith.mulf %6, %15 : vector<16x32xf32>
    %c0_5 = arith.constant 0 : index
    %c0_6 = arith.constant 0 : index
    %17 = vector.load %arg2[%c0_5, %c0_6] : memref<1x32xf32, #tpu.memory_space<vmem>>, vector<1x32xf32>
    %18 = vector.broadcast %17 : vector<1x32xf32> to vector<16x32xf32>
    %19 = arith.mulf %16, %18 : vector<16x32xf32>
    %c0_7 = arith.constant 0 : index
    %c0_8 = arith.constant 0 : index
    %20 = vector.load %arg3[%c0_7, %c0_8] : memref<1x32xf32, #tpu.memory_space<vmem>>, vector<1x32xf32>
    %21 = vector.broadcast %20 : vector<1x32xf32> to vector<16x32xf32>
    %22 = arith.addf %19, %21 : vector<16x32xf32>
    %c0_9 = arith.constant 0 : index
    %c0_10 = arith.constant 0 : index
    %23 = vector.load %arg4[%c0_9, %c0_10] : memref<32x32xf32, #tpu.memory_space<vmem>>, vector<32x32xf32>
    %cst_11 = arith.constant dense<0.000000e+00> : vector<16x32xf32>
    %24 = tpu.matmul %22, %23, %cst_11 {dimension_numbers = #tpu.dot_dimension_numbers<[1], [0], [0], [1], [0, 0, 1, 1], [], []>} : vector<16x32xf32>, vector<32x32xf32>, vector<16x32xf32> -> vector<16x32xf32>
    %c0_12 = arith.constant 0 : index
    %c0_13 = arith.constant 0 : index
    %25 = vector.load %arg5[%c0_12, %c0_13] : memref<1x32xf32, #tpu.memory_space<vmem>>, vector<1x32xf32>
    %26 = vector.broadcast %25 : vector<1x32xf32> to vector<16x32xf32>
    %27 = arith.addf %24, %26 : vector<16x32xf32>
    %c0_14 = arith.constant 0 : index
    %c0_15 = arith.constant 0 : index
    %28 = vector.load %arg6[%c0_14, %c0_15] : memref<16x32xf32, #tpu.memory_space<vmem>>, vector<16x32xf32>
    tpu.vector_store %arg6[%c0_14, %c0_15], %27 {strides = array<i32>} : memref<16x32xf32, #tpu.memory_space<vmem>>, vector<16x32xf32>,
    return
  }
  func.func @transform_0(%arg0: i32) -> (i32, i32) {
    %c0_i32 = arith.constant 0 : i32
    %c0_i32_0 = arith.constant 0 : i32
    return %arg0, %c0_i32 : i32, i32
  }
  func.func @transform_1(%arg0: i32) -> (i32, i32) {
    %c0_i32 = arith.constant 0 : i32
    %c0_i32_0 = arith.constant 0 : i32
    %c0_i32_1 = arith.constant 0 : i32
    return %c0_i32, %c0_i32_0 : i32, i32
  }
  func.func @transform_2(%arg0: i32) -> (i32, i32) {
    %c0_i32 = arith.constant 0 : i32
    %c0_i32_0 = arith.constant 0 : i32
    %c0_i32_1 = arith.constant 0 : i32
    return %c0_i32, %c0_i32_0 : i32, i32
  }
  func.func @transform_3(%arg0: i32) -> (i32, i32) {
    %c0_i32 = arith.constant 0 : i32
    %c0_i32_0 = arith.constant 0 : i32
    %c0_i32_1 = arith.constant 0 : i32
    return %c0_i32, %c0_i32_0 : i32, i32
  }
  func.func @transform_4(%arg0: i32) -> (i32, i32) {
    %c0_i32 = arith.constant 0 : i32
    %c0_i32_0 = arith.constant 0 : i32
    %c0_i32_1 = arith.constant 0 : i32
    return %c0_i32, %c0_i32_0 : i32, i32
  }
  func.func @transform_5(%arg0: i32) -> (i32, i32) {
    %c0_i32 = arith.constant 0 : i32
    %c0_i32_0 = arith.constant 0 : i32
    return %arg0, %c0_i32 : i32, i32
  }
}

</mosaic_0001>

<llo_original>
// kernel: tpu_custom_call.1
$region0: #{tpu_custom_call.1}
  #allocation0 [shape = 'u32[]', space=smem, size = 0x4, offset = 0x4, fixed_abs, tag = 'smem constant byte address 0x4 - core index']
  #allocation1 [shape = 'u32[144,128]{1,0:T(1,128)}', space=vmem, size = 0x12000, scoped, tag = 'internal scratch']
  %s0 = inlined_call_operand.hbm [shape: f32[16,32], index: 0, kind: input, shape index: {}]
  %s1 = inlined_call_operand.vmem [shape: f32[1,32], index: 1, kind: input, shape index: {}]
  %s2 = inlined_call_operand.vmem [shape: f32[1,32], index: 2, kind: input, shape index: {}]
  %s3 = inlined_call_operand.hbm [shape: f32[32,32], index: 3, kind: input, shape index: {}]
  %s4 = inlined_call_operand.vmem [shape: f32[1,32], index: 4, kind: input, shape index: {}]
  %s5 = inlined_call_operand.hbm [shape: f32[16,32], index: 5, kind: output, shape index: {}]
  %s6 = sld [smem:[#allocation0]]
  $region38: #{tpu_custom_call.1} parent=0
    _
  %s8 = ssub.s32 1, %s6
  %s9 = scalar_select 0, %s8, %s6
  $region1: #{tpu_custom_call.1} parent=0
    #allocation2 [shape = 'u8[8192]{0}', space=vmem, size = 0x2000, scoped, tag = 'input window, operand 0, single buffered']
    #allocation3 [shape = 's32[1]{0}', space=sflag, size = 0x4, scoped, tag = 'scoped memory for tpu_custom_call.1']
    #allocation4 [shape = 's32[1]{0}', space=sflag, size = 0x4, scoped, tag = 'scoped memory for tpu_custom_call.1']
    #allocation5 [shape = 'u8[16384]{0}', space=vmem, size = 0x4000, scoped, tag = 'input window, operand 3, single buffered']
    #allocation6 [shape = 's32[1]{0}', space=sflag, size = 0x4, scoped, tag = 'scoped memory for tpu_custom_call.1']
    #allocation7 [shape = 'u8[8192]{0}', space=vmem, size = 0x2000, scoped, tag = 'output window, operand 0, single buffered']
    %10 = vsyncpa [#allocation3], 0
    %11 = vsyncpa [#allocation6], 0
    %12 = vsyncpa [#allocation4], 0
    // Predicated region
    $region2: #{tpu_custom_call.1} parent=1 // pred_check
      _
    $region3: #{tpu_custom_call.1} parent=1 // pred_check_branch
      %14 = sbr.rel (0) target = $region5
    $region4: #{tpu_custom_call.1} parent=1 // pred_region
      %s16 = ssub.s32 256, 256
      %17 = vsyncadd [#allocation3], %s16
      %s18 = sshll.u32 [#allocation2], 4
      %s19 = int_to_ptr.vmem [resolvable:$true] %s18
      %24 = dma.hbm_to_vmem [thread:$0]  %s0, 256, %s19, [#allocation3], 128, 128, 8
    $region5: #{tpu_custom_call.1} parent=1 // pred_fallthru
      _
    // Predicated region
    $region6: #{tpu_custom_call.1} parent=1 // pred_check
      _
    $region7: #{tpu_custom_call.1} parent=1 // pred_check_branch
      %26 = sbr.rel (0) target = $region9
    $region8: #{tpu_custom_call.1} parent=1 // pred_region
      _
    $region9: #{tpu_custom_call.1} parent=1 // pred_fallthru
      _
    // Predicated region
    $region10: #{tpu_custom_call.1} parent=1 // pred_check
      _
    $region11: #{tpu_custom_call.1} parent=1 // pred_check_branch
      %28 = sbr.rel (0) target = $region13
    $region12: #{tpu_custom_call.1} parent=1 // pred_region
      _
    $region13: #{tpu_custom_call.1} parent=1 // pred_fallthru
      _
    // Predicated region
    $region14: #{tpu_custom_call.1} parent=1 // pred_check
      _
    $region15: #{tpu_custom_call.1} parent=1 // pred_check_branch
      %30 = sbr.rel (0) target = $region17
    $region16: #{tpu_custom_call.1} parent=1 // pred_region
      %s32 = ssub.s32 512, 512
      %33 = vsyncadd [#allocation6], %s32
      %s34 = sshll.u32 [#allocation5], 4
      %s35 = int_to_ptr.vmem [resolvable:$true] %s34
      %40 = dma.hbm_to_vmem [thread:$0]  %s3, 512, %s35, [#allocation6], 128, 128, 8
    $region17: #{tpu_custom_call.1} parent=1 // pred_fallthru
      _
    // Predicated region
    $region18: #{tpu_custom_call.1} parent=1 // pred_check
      _
    $region19: #{tpu_custom_call.1} parent=1 // pred_check_branch
      %42 = sbr.rel (0) target = $region21
    $region20: #{tpu_custom_call.1} parent=1 // pred_region
      _
    $region21: #{tpu_custom_call.1} parent=1 // pred_fallthru
      _
    // Predicated region
    $region22: #{tpu_custom_call.1} parent=1 // pred_check
      _
    $region23: #{tpu_custom_call.1} parent=1 // pred_check_branch
      %44 = sbr.rel (0) target = $region25
    $region24: #{tpu_custom_call.1} parent=1 // pred_region
      %45 = dma.done [#allocation3], 256
    $region25: #{tpu_custom_call.1} parent=1 // pred_fallthru
      _
    // Predicated region
    $region26: #{tpu_custom_call.1} parent=1 // pred_check
      _
    $region27: #{tpu_custom_call.1} parent=1 // pred_check_branch
      %47 = sbr.rel (0) target = $region29
    $region28: #{tpu_custom_call.1} parent=1 // pred_region
      %48 = dma.done [#allocation6], 512
    $region29: #{tpu_custom_call.1} parent=1 // pred_fallthru
      _
    %v49 = vld [vmem:[#allocation2] sm:$0xff]
    %v50 = vld [vmem:[#allocation2 + $0x8] sm:$0xff]
    %vm51 = vcmask 261120
    %v52 = vsel %vm51, %v49, 0.0
    %53 = vadd.xlane.f32.xlu0 %v52
    %v54 = vpop.xlane.xlu0 %53
    %v55 = vsel %vm51, %v50, 0.0
    %56 = vadd.xlane.f32.xlu0 %v55
    %v57 = vpop.xlane.xlu0 %56
    %v58 = vrcp.pop 32.0
    %v59 = vmul.f32 %v54, %v58
    %v60 = vmul.f32 %v57, %v58
    %v61 = vsub.f32 %v49, %v59
    %v62 = vsub.f32 %v50, %v60
    %v63 = vmul.f32 %v61, %v61
    %v64 = vmul.f32 %v62, %v62
    %v65 = vsel %vm51, %v63, 0.0
    %66 = vadd.xlane.f32.xlu0 %v65
    %v67 = vpop.xlane.xlu0 %66
    %v68 = vsel %vm51, %v64, 0.0
    %69 = vadd.xlane.f32.xlu0 %v68
    %v70 = vpop.xlane.xlu0 %69
    %v71 = vmul.f32 %v67, %v58
    %v72 = vmul.f32 %v70, %v58
    %v73 = vadd.f32 %v71, 1e-05
    %v74 = vadd.f32 %v72, 1e-05
    %v75 = vrsqrt.pop %v73
    %v76 = vrsqrt.pop %v74
    %v77 = vmul.f32 %v61, %v75
    %v78 = vmul.f32 %v62, %v76
    %v79 = vld [vmem:[%s1] sm:$0x1]
    %v81 = vlaneseq
    %v82 = vshrl.u32 %v81, 7
    %v83 = vsub.s32 0, %v82
    %v84 = vrot.slane %v79, %v83
    %v86 = vmul.f32 %v77, %v84
    %v87 = vmul.f32 %v78, %v84
    %v88 = vld [vmem:[%s2] sm:$0x1]
    %v90 = vlaneseq
    %v91 = vshrl.u32 %v90, 7
    %v92 = vsub.s32 0, %v91
    %v93 = vrot.slane %v88, %v92
    %v95 = vadd.f32 %v86, %v93
    %v96 = vadd.f32 %v87, %v93
    %v97 = vld [vmem:[#allocation5] sm:$0xff]
    %v98 = vld [vmem:[#allocation5 + $0x8] sm:$0xff]
    %v99 = vld [vmem:[#allocation5 + $0x10] sm:$0xff]
    %v100 = vld [vmem:[#allocation5 + $0x18] sm:$0xff]
    %v101 = vld [vmem:[%s4] sm:$0x1]
    %v103 = vlaneseq
    %v104 = vshrl.u32 %v103, 7
    %v105 = vsub.s32 0, %v104
    %v106 = vrot.slane %v101, %v105
    %v109 = vsel %vm51, %v95, 0
    %v112 = vsel %vm51, %v96, 0
    %114 = vmatprep.subr.mxu0 0.0
    %115 = vmatpush1.msra.mxu0 %v97
    %116 = vmatprep.subr.mxu0 0.0
    %117 = vmatpush1.msra.mxu0 %v98
    %118 = vmatprep.subr.mxu0 0.0
    %119 = vmatpush1.msra.mxu0 %v99
    %120 = vmatprep.subr.mxu0 0.0
    %121 = vmatpush1.msra.mxu0 %v100
    %122 = vmatprep.subr.mxu0 0.0
    %123 = vmatpush1.msra.mxu0 0.0
    %124 = vmatprep.subr.mxu0 0.0
    %125 = vmatpush1.msra.mxu0 0.0
    %126 = vmatprep.subr.mxu0 0.0
    %127 = vmatpush1.msra.mxu0 0.0
    %128 = vmatprep.subr.mxu0 0.0
    %129 = vmatpush1.msra.mxu0 0.0
    %130 = vmatprep.subr.mxu0 0.0
    %131 = vmatpush1.msra.mxu0 0.0
    %132 = vmatprep.subr.mxu0 0.0
    %133 = vmatpush1.msra.mxu0 0.0
    %134 = vmatprep.subr.mxu0 0.0
    %135 = vmatpush1.msra.mxu0 0.0
    %136 = vmatprep.subr.mxu0 0.0
    %137 = vmatpush1.msra.mxu0 0.0
    %138 = vmatprep.subr.mxu0 0.0
    %139 = vmatpush1.msra.mxu0 0.0
    %140 = vmatprep.subr.mxu0 0.0
    %141 = vmatpush1.msra.mxu0 0.0
    %142 = vmatprep.subr.mxu0 0.0
    %143 = vmatpush1.msra.mxu0 0.0
    %144 = vmatprep.subr.mxu0 0.0
    %145 = vmatpush1.msra.mxu0 0.0
    %146 = vmatprep.subr.mxu0 0.0
    %147 = vmatpush1.msra.mxu0 0.0
    %148 = vmatprep.subr.mxu0 0.0
    %149 = vmatpush1.msra.mxu0 0.0
    %150 = vmatprep.subr.mxu0 0.0
    %151 = vmatpush1.msra.mxu0 0.0
    %152 = vmatprep.subr.mxu0 0.0
    %153 = vmatpush1.msra.mxu0 0.0
    %154 = vmatprep.subr.mxu0 0.0
    %155 = vmatpush1.msra.mxu0 0.0
    %156 = vmatprep.subr.mxu0 0.0
    %157 = vmatpush1.msra.mxu0 0.0
    %158 = vmatprep.subr.mxu0 0.0
    %159 = vmatpush1.msra.mxu0 0.0
    %160 = vmatprep.subr.mxu0 0.0
    %161 = vmatpush1.msra.mxu0 0.0
    %162 = vmatprep.subr.mxu0 0.0
    %163 = vmatpush1.msra.mxu0 0.0
    %164 = vmatprep.subr.mxu0 0.0
    %165 = vmatpush1.msra.mxu0 0.0
    %166 = vmatprep.subr.mxu0 0.0
    %167 = vmatpush1.msra.mxu0 0.0
    %168 = vmatprep.subr.mxu0 0.0
    %169 = vmatpush1.msra.mxu0 0.0
    %170 = vmatprep.subr.mxu0 0.0
    %171 = vmatpush1.msra.mxu0 0.0
    %172 = vmatprep.subr.mxu0 0.0
    %173 = vmatpush1.msra.mxu0 0.0
    %174 = vmatprep.subr.mxu0 0.0
    %175 = vmatpush1.msra.mxu0 0.0
    %176 = vmatprep.subr.mxu0 0.0
    %177 = vmatpush1.msra.mxu0 0.0
    %178 = vmatprep.mubr.f32.mxu0 0.0
    %179 = vmatmul.mubr.f32.gmra.mrb[0].mxu0 %v109
    %v180 = vpop.f32.mrb[0].mxu0
    %v181 = vadd.f32 %v106, %v180
    %v182 = vpop.f32.mrb[0].mxu0
    %183 = vmatprep.mubr.f32.mxu0 0.0
    %184 = vmatmul.mubr.f32.gmra.mrb[0].mxu0 %v112
    %v185 = vpop.f32.mrb[0].mxu0
    %v186 = vadd.f32 %v106, %v185
    %v187 = vpop.f32.mrb[0].mxu0
    %188 = vdwg.mxu0
    %189 = vst.msk [vmem:[#allocation7] sm:$0xff] %vm51, %v181
    %190 = vst.msk [vmem:[#allocation7 + $0x8] sm:$0xff] %vm51, %v186
    // Predicated region
    $region30: #{tpu_custom_call.1} parent=1 // pred_check
      _
    $region31: #{tpu_custom_call.1} parent=1 // pred_check_branch
      %192 = sbr.rel (0) target = $region33
    $region32: #{tpu_custom_call.1} parent=1 // pred_region
      %s194 = ssub.s32 256, 256
      %195 = vsyncadd [#allocation4], %s194
      %s196 = sshll.u32 [#allocation7], 4
      %s197 = int_to_ptr.vmem [resolvable:$true] %s196
      %202 = dma.vmem_to_hbm [thread:$0]  %s197, 256, %s5, [#allocation4], 128, 128, 8
    $region33: #{tpu_custom_call.1} parent=1 // pred_fallthru
      _
    // Predicated region
    $region34: #{tpu_custom_call.1} parent=1 // pred_check
      _
    $region35: #{tpu_custom_call.1} parent=1 // pred_check_branch
      %204 = sbr.rel (0) target = $region37
    $region36: #{tpu_custom_call.1} parent=1 // pred_region
      %205 = dma.done [#allocation4], 256
    $region37: #{tpu_custom_call.1} parent=1 // pred_fallthru
      _
    %206 = vsyncpa [#allocation3], 1
    %207 = vsyncpa [#allocation6], 1
    %208 = vsyncpa [#allocation4], 1

</llo_original>
